<compile_context>
chip_gen: v6e
topology: v6e:2x2x1
jax: 0.10.0
libtpu: 0.0.40
codegen_flags: <defaults>
</compile_context>

<pallas_src>
import functools

import jax
import jax.numpy as jnp
from jax.experimental import pallas as pl
from jax.experimental.pallas import tpu as pltpu


def _make_divisible(v, divisor=1, min_value=None, round_limit=0.9):
    # timm.models.layers.make_divisible (rd_divisor defaults to 1 for GatherExcite)
    min_value = min_value or divisor
    new_v = max(min_value, int(v + divisor / 2) // divisor * divisor)
    if new_v < round_limit * v:
        new_v += divisor
    return new_v


def _vmem_plan():
    """Return (working-set budget, vmem_limit_bytes) for the current TPU gen."""
    phys = None
    try:
        phys = getattr(pltpu.get_tpu_info(), "vmem_capacity_bytes", None)
    except Exception:
        phys = None
    if phys is None:
        phys = 64 << 20                      # conservative: v7x per-core VMEM
    if phys >= (96 << 20):                   # v5e / v6e: 128 MiB physical VMEM
        return 64 << 20, 96 << 20
    return 40 << 20, 56 << 20                # v7x: 64 MiB per TensorCore


def _pick_nb(N, C, HW, itemsize, budget):
    """Batch-block size: double-buffered in+out fits `budget`, ~8 grid steps
    (>=3-4 per v7x TensorCore), and each block >= ~1 MiB when N allows it."""
    bytes_per_image = C * HW * itemsize
    per_image_ws = 4 * bytes_per_image        # 2x in + 2x out buffers
    nb_max = max(1, budget // per_image_ws)
    target_steps = 8
    nb_steps = max(1, (N + target_steps - 1) // target_steps)
    min_block = 1 << 20
    nb_min = max(1, (min_block + bytes_per_image - 1) // bytes_per_image)
    nb = min(nb_max, max(nb_steps, nb_min))
    return max(1, min(nb, N))


# --------------------------------------------------------------------------
# Main path: one kernel, whole (NB, C, HW) slab resident per grid step.
# --------------------------------------------------------------------------
def _ge_block_kernel(x_ref, w1t_ref, b1_ref, w2t_ref, b2_ref, o_ref):
    # Pass 1: "gather" = global pooling. The 1/HW mean scale is folded into
    # w1t, so a plain (f32-accumulated) lane sum is exact.
    pooled = jnp.sum(x_ref[...].astype(jnp.float32), axis=2)            # (NB, C)
    # ConvMlp (two 1x1 convs) as batched matmuls + sigmoid gate (all f32).
    s = jnp.dot(pooled, w1t_ref[...],
                preferred_element_type=jnp.float32) + b1_ref[...]       # (NB, Crp)
    s = jnp.maximum(s, 0.0)
    z = jnp.dot(s, w2t_ref[...],
                preferred_element_type=jnp.float32) + b2_ref[...]       # (NB, C)
    gate = jax.nn.sigmoid(z).astype(x_ref.dtype)                        # (NB, C)
    # Pass 2: "excite" — re-read the VMEM ref (don't keep the slab live as one
    # SSA value) and store with an explicit cast.
    o_ref[...] = (x_ref[...] * gate[:, :, None]).astype(o_ref.dtype)


# --------------------------------------------------------------------------
# Fallback path: spatially chunked (two streaming passes over x).
# --------------------------------------------------------------------------
def _pool_chunk_kernel(x_ref, sum_ref, *, hw, hw_chunk):
    k = pl.program_id(1)

    @pl.when(k == 0)
    def _():
        sum_ref[...] = jnp.zeros_like(sum_ref)

    # Mask the ragged final spatial chunk (out-of-bounds block lanes are undefined).
    lane = jax.lax.broadcasted_iota(jnp.int32, (1, 1, x_ref.shape[-1]), 2) + k * hw_chunk
    xm = jnp.where(lane < hw, x_ref[...].astype(jnp.float32), 0.0)
    sum_ref[...] += jnp.sum(xm, axis=2, keepdims=True)                  # (1, C, 1)


def _excite_chunk_kernel(x_ref, gate_ref, o_ref):
    g = gate_ref[...].astype(x_ref.dtype)                               # (1, C, 1)
    o_ref[...] = (x_ref[...] * g).astype(o_ref.dtype)


def _ge_fallback(x3, w1t, b1r, w2t, b2r, *, N, C, HW, dtype, itemsize,
                 budget, vmem_limit):
    # Spatial chunk: 2x in + 2x out double-buffered chunks fit the budget.
    hwc = max(128, (budget // (4 * C * itemsize)) // 128 * 128)
    n_hw = pl.cdiv(HW, hwc)

    # Pass 1: accumulate per-image channel sums over spatial chunks.
    sums = pl.pallas_call(
        functools.partial(_pool_chunk_kernel, hw=HW, hw_chunk=hwc),
        out_shape=jax.ShapeDtypeStruct((N, C, 1), jnp.float32),
        grid_spec=pltpu.PrefetchScalarGridSpec(
            num_scalar_prefetch=0,
            grid=(N, n_hw),
            in_specs=[pl.BlockSpec((1, C, hwc), lambda n, k: (n, 0, k))],
            out_specs=pl.BlockSpec((1, C, 1), lambda n, k: (n, 0, 0)),
        ),
        compiler_params=pltpu.CompilerParams(
            dimension_semantics=("parallel", "arbitrary"),
            vmem_limit_bytes=vmem_limit),
    )(x3)

    # Tiny (N, C) MLP + sigmoid in plain JAX (1/HW fold lives in w1t).
    pooled = sums[:, :, 0]                                              # (N, C) f32
    s = jnp.maximum(pooled @ w1t + b1r, 0.0)
    z = s @ w2t + b2r
    gate = jax.nn.sigmoid(z)[:, :, None]                                # (N, C, 1)

    # Pass 2: stream x again and apply the gate.
    out3 = pl.pallas_call(
        _excite_chunk_kernel,
        out_shape=jax.ShapeDtypeStruct((N, C, HW), dtype),
        grid_spec=pltpu.PrefetchScalarGridSpec(
            num_scalar_prefetch=0,
            grid=(N, n_hw),
            in_specs=[pl.BlockSpec((1, C, hwc), lambda n, k: (n, 0, k)),
                      pl.BlockSpec((1, C, 1), lambda n, k: (n, 0, 0))],
            out_specs=pl.BlockSpec((1, C, hwc), lambda n, k: (n, 0, k)),
        ),
        compiler_params=pltpu.CompilerParams(
            dimension_semantics=("parallel", "parallel"),
            vmem_limit_bytes=vmem_limit),
    )(x3, gate)
    return out3


# --------------------------------------------------------------------------
# Wrapper
# --------------------------------------------------------------------------
def ge_module_pallas(x_nchw, w1, b1, w2, b2, *, vmem_budget_bytes=None):
    N, C, H, W = x_nchw.shape
    HW = H * W
    Cr = w1.shape[0]
    dtype = x_nchw.dtype
    itemsize = jnp.dtype(dtype).itemsize

    budget, vmem_limit = _vmem_plan()
    if vmem_budget_bytes is not None:
        budget = int(vmem_budget_bytes)

    # Metadata-only reshape (no extra HBM pass).
    x3 = x_nchw.reshape(N, C, HW)

    # Fold the 1/HW mean into fc1, pre-transpose, and zero-pad Cr to a
    # lane-friendly (128-multiple) width. Padding is exact: extra fc1 columns /
    # fc2 rows are zero, so relu(0)=0 contributes nothing.
    Crp = ((Cr + 127) // 128) * 128
    w1t = jnp.zeros((C, Crp), jnp.float32).at[:, :Cr].set(
        (w1.astype(jnp.float32) / float(HW)).T)
    b1r = jnp.zeros((1, Crp), jnp.float32).at[:, :Cr].set(
        b1.reshape(-1).astype(jnp.float32))
    w2t = jnp.zeros((Crp, C), jnp.float32).at[:Cr, :].set(
        w2.astype(jnp.float32).T)
    b2r = b2.reshape(1, C).astype(jnp.float32)

    per_image_ws = 4 * C * HW * itemsize      # 2x in + 2x out double-buffered
    if per_image_ws > budget:
        # A single image's (C, HW) slab doesn't fit: spatially chunked 2-pass path.
        out3 = _ge_fallback(x3, w1t, b1r, w2t, b2r, N=N, C=C, HW=HW, dtype=dtype,
                            itemsize=itemsize, budget=budget, vmem_limit=vmem_limit)
        return out3.reshape(N, C, H, W)

    NB = _pick_nb(N, C, HW, itemsize, budget)
    grid = (pl.cdiv(N, NB),)

    bytes_accessed = 2 * N * C * HW * itemsize + (2 * C * Crp + Crp + C) * 4
    flops = 2 * N * C * HW + 4 * N * C * Crp
    cost = pl.CostEstimate(flops=int(flops),
                           transcendentals=int(N * C),
                           bytes_accessed=int(bytes_accessed))

    out3 = pl.pallas_call(
        _ge_block_kernel,
        out_shape=jax.ShapeDtypeStruct((N, C, HW), dtype),
        grid_spec=pltpu.PrefetchScalarGridSpec(
            num_scalar_prefetch=0,
            grid=grid,
            in_specs=[
                pl.BlockSpec((NB, C, HW), lambda n: (n, 0, 0)),
                pl.BlockSpec((C, Crp), lambda n: (0, 0)),
                pl.BlockSpec((1, Crp), lambda n: (0, 0)),
                pl.BlockSpec((Crp, C), lambda n: (0, 0)),
                pl.BlockSpec((1, C), lambda n: (0, 0)),
            ],
            out_specs=pl.BlockSpec((NB, C, HW), lambda n: (n, 0, 0)),
        ),
        compiler_params=pltpu.CompilerParams(
            dimension_semantics=("parallel",),
            vmem_limit_bytes=vmem_limit),
        cost_estimate=cost,
    )(x3, w1t, b1r, w2t, b2r)

    return out3.reshape(N, C, H, W)


def ge_module_ref(x, w1, b1, w2, b2):
    # pure-JAX reference of timm GatherExcite forward (extent=0 defaults)
    xf = x.astype(jnp.float32)
    pooled = xf.mean(axis=(2, 3), keepdims=True)                       # (N, C, 1, 1)
    s = jnp.einsum('rc,ncij->nrij', w1, pooled) + b1.reshape(1, -1, 1, 1)
    s = jnp.maximum(s, 0.0)
    z = jnp.einsum('cr,nrij->ncij', w2, s) + b2.reshape(1, -1, 1, 1)
    return xf * jax.nn.sigmoid(z)


if __name__ == "__main__":
    N, C = 2, 32
    rd_ratio = 1.0 / 16
    Cr = _make_divisible(C * rd_ratio, divisor=1)                      # = 2

    key = jax.random.PRNGKey(0)
    kx1, kx2, k1, k2, k3, k4 = jax.random.split(key, 6)

    # fc1: Conv2d(C, Cr, 1, bias=True) ; fc2: Conv2d(Cr, C, 1, bias=True)
    w1 = jax.random.normal(k1, (Cr, C), dtype=jnp.float32) * 0.2
    b1 = jax.random.normal(k2, (Cr, 1), dtype=jnp.float32) * 0.1
    w2 = jax.random.normal(k3, (C, Cr), dtype=jnp.float32) * 0.2
    b2 = jax.random.normal(k4, (C, 1), dtype=jnp.float32) * 0.1

    # Case 1: H*W a multiple of 128 (16x16), main single-kernel path.
    x = jax.random.normal(kx1, (N, C, 16, 16), dtype=jnp.float32)
    y = ge_module_pallas(x, w1, b1, w2, b2)
    jax.block_until_ready(y)
    y_ref = ge_module_ref(x, w1, b1, w2, b2)
    assert y.shape == x.shape
    assert jnp.allclose(y, y_ref, atol=1e-5, rtol=1e-5)

    # Case 2: ragged H*W (14x14 = 196): no wrapper pad/slice, full-extent last dim.
    x2 = jax.random.normal(kx2, (N, C, 14, 14), dtype=jnp.float32)
    y2 = ge_module_pallas(x2, w1, b1, w2, b2)
    jax.block_until_ready(y2)
    y2_ref = ge_module_ref(x2, w1, b1, w2, b2)
    assert y2.shape == x2.shape
    assert jnp.allclose(y2, y2_ref, atol=1e-5, rtol=1e-5)

    # Case 3: force the spatially-chunked fallback path with a tiny VMEM budget.
    y3 = ge_module_pallas(x2, w1, b1, w2, b2, vmem_budget_bytes=64 * 1024)
    jax.block_until_ready(y3)
    assert jnp.allclose(y3, y2_ref, atol=1e-5, rtol=1e-5)

    # Case 4: bf16 activations (streams bf16, pools/MLP in f32, stores bf16).
    xb = x2.astype(jnp.bfloat16)
    yb = ge_module_pallas(xb, w1, b1, w2, b2)
    jax.block_until_ready(yb)
    assert yb.dtype == jnp.bfloat16 and yb.shape == xb.shape
    yb_ref = ge_module_ref(xb, w1, b1, w2, b2)
    assert jnp.allclose(yb.astype(jnp.float32), yb_ref, atol=5e-2, rtol=5e-2)

    print("KERNEL_OK")
</pallas_src>

<mosaic_0001>
module attributes {stable_mosaic.version = 11 : i64} {
  func.func @_ge_block_kernel(%arg0: i32, %arg1: memref<2x32x256xf32, #tpu.memory_space<vmem>>, %arg2: memref<32x128xf32, #tpu.memory_space<vmem>>, %arg3: memref<1x128xf32, #tpu.memory_space<vmem>>, %arg4: memref<128x32xf32, #tpu.memory_space<vmem>>, %arg5: memref<1x32xf32, #tpu.memory_space<vmem>>, %arg6: memref<2x32x256xf32, #tpu.memory_space<vmem>>) attributes {dimension_semantics = [#tpu.dimension_semantics<parallel>], iteration_bounds = array<i64: 1>, scalar_prefetch = 0 : i64, scratch_operands = 0 : i64, tpu.core_type = #tpu.core_type<tc>, window_params = [{transform_indices = @transform_0, window_bounds = array<i64: 2, 32, 256>}, {pipeline_mode = #tpu.pipeline_mode<synchronous>, transform_indices = @transform_1, window_bounds = array<i64: 32, 128>}, {pipeline_mode = #tpu.pipeline_mode<synchronous>, transform_indices = @transform_2, window_bounds = array<i64: 1, 128>}, {pipeline_mode = #tpu.pipeline_mode<synchronous>, transform_indices = @transform_3, window_bounds = array<i64: 128, 32>}, {pipeline_mode = #tpu.pipeline_mode<synchronous>, transform_indices = @transform_4, window_bounds = array<i64: 1, 32>}, {transform_indices = @transform_5, window_bounds = array<i64: 2, 32, 256>}]} {
    %c0 = arith.constant 0 : index
    %c0_0 = arith.constant 0 : index
    %c0_1 = arith.constant 0 : index
    %0 = vector.load %arg1[%c0, %c0_0, %c0_1] : memref<2x32x256xf32, #tpu.memory_space<vmem>>, vector<2x32x256xf32>
    %cst = arith.constant dense<0.000000e+00> : vector<2x32xf32>
    %1 = vector.multi_reduction <add>, %0, %cst [2] : vector<2x32x256xf32> to vector<2x32xf32>
    %c0_2 = arith.constant 0 : index
    %c0_3 = arith.constant 0 : index
    %2 = vector.load %arg2[%c0_2, %c0_3] : memref<32x128xf32, #tpu.memory_space<vmem>>, vector<32x128xf32>
    %cst_4 = arith.constant dense<0.000000e+00> : vector<2x128xf32>
    %3 = tpu.matmul %1, %2, %cst_4 {dimension_numbers = #tpu.dot_dimension_numbers<[1], [0], [0], [1], [0, 0, 1, 1], [], []>} : vector<2x32xf32>, vector<32x128xf32>, vector<2x128xf32> -> vector<2x128xf32>
    %c0_5 = arith.constant 0 : index
    %c0_6 = arith.constant 0 : index
    %4 = vector.load %arg3[%c0_5, %c0_6] : memref<1x128xf32, #tpu.memory_space<vmem>>, vector<1x128xf32>
    %5 = vector.broadcast %4 : vector<1x128xf32> to vector<2x128xf32>
    %6 = arith.addf %3, %5 : vector<2x128xf32>
    %cst_7 = arith.constant 0.000000e+00 : f32
    %7 = vector.broadcast %cst_7 : f32 to vector<2x128xf32>
    %8 = arith.maximumf %6, %7 : vector<2x128xf32>
    %c0_8 = arith.constant 0 : index
    %c0_9 = arith.constant 0 : index
    %9 = vector.load %arg4[%c0_8, %c0_9] : memref<128x32xf32, #tpu.memory_space<vmem>>, vector<128x32xf32>
    %cst_10 = arith.constant dense<0.000000e+00> : vector<2x32xf32>
    %10 = tpu.matmul %8, %9, %cst_10 {dimension_numbers = #tpu.dot_dimension_numbers<[1], [0], [0], [1], [0, 0, 1, 1], [], []>} : vector<2x128xf32>, vector<128x32xf32>, vector<2x32xf32> -> vector<2x32xf32>
    %c0_11 = arith.constant 0 : index
    %c0_12 = arith.constant 0 : index
    %11 = vector.load %arg5[%c0_11, %c0_12] : memref<1x32xf32, #tpu.memory_space<vmem>>, vector<1x32xf32>
    %12 = vector.broadcast %11 : vector<1x32xf32> to vector<2x32xf32>
    %13 = arith.addf %10, %12 : vector<2x32xf32>
    %14 = arith.negf %13 : vector<2x32xf32>
    %15 = math.exp %14 : vector<2x32xf32>
    %cst_13 = arith.constant 1.000000e+00 : f32
    %16 = vector.broadcast %cst_13 : f32 to vector<2x32xf32>
    %17 = arith.addf %16, %15 : vector<2x32xf32>
    %18 = arith.divf %16, %17 : vector<2x32xf32>
    %c0_14 = arith.constant 0 : index
    %c0_15 = arith.constant 0 : index
    %c0_16 = arith.constant 0 : index
    %19 = vector.load %arg1[%c0_14, %c0_15, %c0_16] : memref<2x32x256xf32, #tpu.memory_space<vmem>>, vector<2x32x256xf32>
    %20 = vector.shape_cast %18 : vector<2x32xf32> to vector<2x32x1xf32>
    %21 = vector.broadcast %20 : vector<2x32x1xf32> to vector<2x32x256xf32>
    %22 = arith.mulf %19, %21 : vector<2x32x256xf32>
    %c0_17 = arith.constant 0 : index
    %c0_18 = arith.constant 0 : index
    %c0_19 = arith.constant 0 : index
    %23 = vector.load %arg6[%c0_17, %c0_18, %c0_19] : memref<2x32x256xf32, #tpu.memory_space<vmem>>, vector<2x32x256xf32>
    tpu.vector_store %arg6[%c0_17, %c0_18, %c0_19], %22 {strides = array<i32>} : memref<2x32x256xf32, #tpu.memory_space<vmem>>, vector<2x32x256xf32>,
    return
  }
  func.func @transform_0(%arg0: i32) -> (i32, i32, i32) {
    %c0_i32 = arith.constant 0 : i32
    %c0_i32_0 = arith.constant 0 : i32
    %c0_i32_1 = arith.constant 0 : i32
    return %arg0, %c0_i32, %c0_i32_0 : i32, i32, i32
  }
  func.func @transform_1(%arg0: i32) -> (i32, i32) {
    %c0_i32 = arith.constant 0 : i32
    %c0_i32_0 = arith.constant 0 : i32
    %c0_i32_1 = arith.constant 0 : i32
    return %c0_i32, %c0_i32_0 : i32, i32
  }
  func.func @transform_2(%arg0: i32) -> (i32, i32) {
    %c0_i32 = arith.constant 0 : i32
    %c0_i32_0 = arith.constant 0 : i32
    %c0_i32_1 = arith.constant 0 : i32
    return %c0_i32, %c0_i32_0 : i32, i32
  }
  func.func @transform_3(%arg0: i32) -> (i32, i32) {
    %c0_i32 = arith.constant 0 : i32
    %c0_i32_0 = arith.constant 0 : i32
    %c0_i32_1 = arith.constant 0 : i32
    return %c0_i32, %c0_i32_0 : i32, i32
  }
  func.func @transform_4(%arg0: i32) -> (i32, i32) {
    %c0_i32 = arith.constant 0 : i32
    %c0_i32_0 = arith.constant 0 : i32
    %c0_i32_1 = arith.constant 0 : i32
    return %c0_i32, %c0_i32_0 : i32, i32
  }
  func.func @transform_5(%arg0: i32) -> (i32, i32, i32) {
    %c0_i32 = arith.constant 0 : i32
    %c0_i32_0 = arith.constant 0 : i32
    %c0_i32_1 = arith.constant 0 : i32
    return %arg0, %c0_i32, %c0_i32_0 : i32, i32, i32
  }
}

</mosaic_0001>

<llo_original>
// kernel: tpu_custom_call.1
$region0: #{tpu_custom_call.1}
  #allocation0 [shape = 'u32[]', space=smem, size = 0x4, offset = 0x4, fixed_abs, tag = 'smem constant byte address 0x4 - core index']
  #allocation1 [shape = 'u32[144,128]{1,0:T(1,128)}', space=vmem, size = 0x12000, scoped, tag = 'internal scratch']
  %s0 = inlined_call_operand.vmem [shape: f32[2,32,256], index: 0, kind: input, shape index: {}]
  %s1 = inlined_call_operand.vmem [shape: f32[32,128], index: 1, kind: input, shape index: {}]
  %s2 = inlined_call_operand.vmem [shape: f32[1,128], index: 2, kind: input, shape index: {}]
  %s3 = inlined_call_operand.vmem [shape: f32[128,32], index: 3, kind: input, shape index: {}]
  %s4 = inlined_call_operand.vmem [shape: f32[1,32], index: 4, kind: input, shape index: {}]
  %s5 = inlined_call_operand.hbm [shape: f32[2,32,256], index: 5, kind: output, shape index: {}]
  %s6 = sld [smem:[#allocation0]]
  $region30: #{tpu_custom_call.1} parent=0
    _
  %s8 = ssub.s32 1, %s6
  %s9 = scalar_select 0, %s8, %s6
  $region1: #{tpu_custom_call.1} parent=0
    #allocation2 [shape = 'u8[65536]{0}', space=vmem, size = 0x10000, scoped, tag = 'output window, operand 0, single buffered']
    #allocation3 [shape = 's32[1]{0}', space=sflag, size = 0x4, scoped, tag = 'scoped memory for tpu_custom_call.1']
    %10 = vsyncpa [#allocation3], 0
    // Predicated region
    $region2: #{tpu_custom_call.1} parent=1 // pred_check
      _
    $region3: #{tpu_custom_call.1} parent=1 // pred_check_branch
      %12 = sbr.rel (0) target = $region5
    $region4: #{tpu_custom_call.1} parent=1 // pred_region
      _
    $region5: #{tpu_custom_call.1} parent=1 // pred_fallthru
      _
    // Predicated region
    $region6: #{tpu_custom_call.1} parent=1 // pred_check
      _
    $region7: #{tpu_custom_call.1} parent=1 // pred_check_branch
      %14 = sbr.rel (0) target = $region9
    $region8: #{tpu_custom_call.1} parent=1 // pred_region
      _
    $region9: #{tpu_custom_call.1} parent=1 // pred_fallthru
      _
    // Predicated region
    $region10: #{tpu_custom_call.1} parent=1 // pred_check
      _
    $region11: #{tpu_custom_call.1} parent=1 // pred_check_branch
      %16 = sbr.rel (0) target = $region13
    $region12: #{tpu_custom_call.1} parent=1 // pred_region
      _
    $region13: #{tpu_custom_call.1} parent=1 // pred_fallthru
      _
    // Predicated region
    $region14: #{tpu_custom_call.1} parent=1 // pred_check
      _
    $region15: #{tpu_custom_call.1} parent=1 // pred_check_branch
      %18 = sbr.rel (0) target = $region17
    $region16: #{tpu_custom_call.1} parent=1 // pred_region
      _
    $region17: #{tpu_custom_call.1} parent=1 // pred_fallthru
      _
    // Predicated region
    $region18: #{tpu_custom_call.1} parent=1 // pred_check
      _
    $region19: #{tpu_custom_call.1} parent=1 // pred_check_branch
      %20 = sbr.rel (0) target = $region21
    $region20: #{tpu_custom_call.1} parent=1 // pred_region
      _
    $region21: #{tpu_custom_call.1} parent=1 // pred_fallthru
      _
    %v21 = vld [vmem:[%s0] sm:$0xff]
    %v22 = vld [vmem:[%s0 + $0x8] sm:$0xff]
    %v23 = vld [vmem:[%s0 + $0x10] sm:$0xff]
    %v24 = vld [vmem:[%s0 + $0x18] sm:$0xff]
    %v25 = vld [vmem:[%s0 + $0x20] sm:$0xff]
    %v26 = vld [vmem:[%s0 + $0x28] sm:$0xff]
    %v27 = vld [vmem:[%s0 + $0x30] sm:$0xff]
    %v28 = vld [vmem:[%s0 + $0x38] sm:$0xff]
    %v29 = vld [vmem:[%s0 + $0x40] sm:$0xff]
    %v30 = vld [vmem:[%s0 + $0x48] sm:$0xff]
    %v31 = vld [vmem:[%s0 + $0x50] sm:$0xff]
    %v32 = vld [vmem:[%s0 + $0x58] sm:$0xff]
    %v33 = vld [vmem:[%s0 + $0x60] sm:$0xff]
    %v34 = vld [vmem:[%s0 + $0x68] sm:$0xff]
    %v35 = vld [vmem:[%s0 + $0x70] sm:$0xff]
    %v36 = vld [vmem:[%s0 + $0x78] sm:$0xff]
    %v37 = vadd.f32 %v21, %v22
    %38 = vadd.xlane.f32.xlu0 %v37
    %v39 = vpop.xlane.xlu0 %38
    %v40 = vadd.f32 %v23, %v24
    %41 = vadd.xlane.f32.xlu0 %v40
    %v42 = vpop.xlane.xlu0 %41
    %v43 = vadd.f32 %v25, %v26
    %44 = vadd.xlane.f32.xlu0 %v43
    %v45 = vpop.xlane.xlu0 %44
    %v46 = vadd.f32 %v27, %v28
    %47 = vadd.xlane.f32.xlu0 %v46
    %v48 = vpop.xlane.xlu0 %47
    %v49 = vadd.f32 %v29, %v30
    %50 = vadd.xlane.f32.xlu0 %v49
    %v51 = vpop.xlane.xlu0 %50
    %v52 = vadd.f32 %v31, %v32
    %53 = vadd.xlane.f32.xlu0 %v52
    %v54 = vpop.xlane.xlu0 %53
    %v55 = vadd.f32 %v33, %v34
    %56 = vadd.xlane.f32.xlu0 %v55
    %v57 = vpop.xlane.xlu0 %56
    %v58 = vadd.f32 %v35, %v36
    %59 = vadd.xlane.f32.xlu0 %v58
    %v60 = vpop.xlane.xlu0 %59
    %v61 = vld [vmem:[%s1] sm:$0xff]
    %v62 = vld [vmem:[%s1 + $0x8] sm:$0xff]
    %v63 = vld [vmem:[%s1 + $0x10] sm:$0xff]
    %v64 = vld [vmem:[%s1 + $0x18] sm:$0xff]
    %v65 = vld [vmem:[%s2] sm:$0x1]
    %v67 = vlaneseq
    %v68 = vshrl.u32 %v67, 7
    %v69 = vsub.s32 0, %v68
    %v70 = vrot.slane %v65, %v69
    %v80 = vlaneseq
    %v81 = vand.u32 %v80, 127
    %v82 = vlaneseq
    %v83 = vshrl.u32 %v82, 7
    %v84 = vsub.s32 %v81, %v83
    %v85 = vrot.slane %v39, %v84
    %v86 = vadd.s32 %v81, 4294967288
    %v87 = vlaneseq
    %v88 = vshrl.u32 %v87, 7
    %v89 = vsub.s32 %v86, %v88
    %v90 = vrot.slane %v42, %v89
    %vm91 = vcmask 130112
    %v92 = vsel %vm91, %v90, %v85
    %v93 = vadd.s32 %v81, 4294967280
    %v94 = vlaneseq
    %v95 = vshrl.u32 %v94, 7
    %v96 = vsub.s32 %v93, %v95
    %v97 = vrot.slane %v45, %v96
    %vm98 = vcmask 195712
    %v99 = vsel %vm98, %v97, %v92
    %v100 = vadd.s32 %v81, 4294967272
    %v101 = vlaneseq
    %v102 = vshrl.u32 %v101, 7
    %v103 = vsub.s32 %v100, %v102
    %v104 = vrot.slane %v48, %v103
    %vm105 = vcmask 261312
    %v106 = vsel %vm105, %v104, %v99
    %v107 = vlaneseq
    %v108 = vshrl.u32 %v107, 7
    %v109 = vsub.s32 %v81, %v108
    %v110 = vrot.slane %v51, %v109
    %v111 = vlaneseq
    %v112 = vshrl.u32 %v111, 7
    %v113 = vsub.s32 %v86, %v112
    %v114 = vrot.slane %v54, %v113
    %v115 = vsel %vm91, %v114, %v110
    %v116 = vlaneseq
    %v117 = vshrl.u32 %v116, 7
    %v118 = vsub.s32 %v93, %v117
    %v119 = vrot.slane %v57, %v118
    %v120 = vsel %vm98, %v119, %v115
    %v121 = vlaneseq
    %v122 = vshrl.u32 %v121, 7
    %v123 = vsub.s32 %v100, %v122
    %v124 = vrot.slane %v60, %v123
    %v125 = vsel %vm105, %v124, %v120
    %vm126 = vcmask 1041409
    %v127 = vsel %vm126, %v125, %v106
    %vm128 = vcmask 261120
    %v129 = vsel %vm128, %v127, 0
    %131 = vmatprep.subr.mxu0 0.0
    %132 = vmatpush1.msra.mxu0 0.0
    %133 = vmatprep.subr.mxu0 0.0
    %134 = vmatpush1.msra.mxu0 0.0
    %135 = vmatprep.subr.mxu0 0.0
    %136 = vmatpush1.msra.mxu0 0.0
    %137 = vmatprep.subr.mxu0 0.0
    %138 = vmatpush1.msra.mxu0 0.0
    %139 = vmatprep.subr.mxu0 0.0
    %140 = vmatpush1.msra.mxu0 0.0
    %141 = vmatprep.subr.mxu0 0.0
    %142 = vmatpush1.msra.mxu0 0.0
    %143 = vmatprep.subr.mxu0 0.0
    %144 = vmatpush1.msra.mxu0 0.0
    %145 = vmatprep.subr.mxu0 0.0
    %146 = vmatpush1.msra.mxu0 0.0
    %147 = vmatprep.subr.mxu0 0.0
    %148 = vmatpush1.msra.mxu0 0.0
    %149 = vmatprep.subr.mxu0 0.0
    %150 = vmatpush1.msra.mxu0 0.0
    %151 = vmatprep.subr.mxu0 0.0
    %152 = vmatpush1.msra.mxu0 0.0
    %153 = vmatprep.subr.mxu0 0.0
    %154 = vmatpush1.msra.mxu0 0.0
    %155 = vmatprep.subr.mxu0 0.0
    %156 = vmatpush1.msra.mxu0 %v64
    %157 = vmatprep.subr.mxu0 0.0
    %158 = vmatpush1.msra.mxu0 %v63
    %159 = vmatprep.subr.mxu0 0.0
    %160 = vmatpush1.msra.mxu0 %v62
    %161 = vmatprep.subr.mxu0 0.0
    %162 = vmatpush1.msra.mxu0 %v61
    %163 = vmatprep.subr.mxu0 0.0
    %164 = vmatpush2.msra.mxu0 0.0
    %165 = vmatprep.subr.mxu0 0.0
    %166 = vmatpush2.msra.mxu0 0.0
    %167 = vmatprep.subr.mxu0 0.0
    %168 = vmatpush2.msra.mxu0 0.0
    %169 = vmatprep.subr.mxu0 0.0
    %170 = vmatpush2.msra.mxu0 0.0
    %171 = vmatprep.subr.mxu0 0.0
    %172 = vmatpush2.msra.mxu0 0.0
    %173 = vmatprep.subr.mxu0 0.0
    %174 = vmatpush2.msra.mxu0 0.0
    %175 = vmatprep.subr.mxu0 0.0
    %176 = vmatpush2.msra.mxu0 0.0
    %177 = vmatprep.subr.mxu0 0.0
    %178 = vmatpush2.msra.mxu0 0.0
    %179 = vmatprep.subr.mxu0 0.0
    %180 = vmatpush2.msra.mxu0 0.0
    %181 = vmatprep.subr.mxu0 0.0
    %182 = vmatpush2.msra.mxu0 0.0
    %183 = vmatprep.subr.mxu0 0.0
    %184 = vmatpush2.msra.mxu0 0.0
    %185 = vmatprep.subr.mxu0 0.0
    %186 = vmatpush2.msra.mxu0 0.0
    %187 = vmatprep.subr.mxu0 0.0
    %188 = vmatpush2.msra.mxu0 0.0
    %189 = vmatprep.subr.mxu0 0.0
    %190 = vmatpush2.msra.mxu0 0.0
    %191 = vmatprep.subr.mxu0 0.0
    %192 = vmatpush2.msra.mxu0 0.0
    %193 = vmatprep.subr.mxu0 0.0
    %194 = vmatpush2.msra.mxu0 0.0
    %195 = vmatprep.mubr.f32.mxu0 0.0
    %196 = vmatmul.mubr.f32.gmra.mxu0 %v129
    %v197 = vpop.f32.mrf.mxu0
    %v198 = vadd.f32 %v70, %v197
    %v199 = vpop.f32.mrf.mxu0
    %200 = vdwg.mxu0
    %v201 = vmax.f32 %v198, 0.0
    %v202 = vld [vmem:[%s3] sm:$0xff]
    %v203 = vld [vmem:[%s3 + $0x8] sm:$0xff]
    %v204 = vld [vmem:[%s3 + $0x10] sm:$0xff]
    %v205 = vld [vmem:[%s3 + $0x18] sm:$0xff]
    %v206 = vld [vmem:[%s3 + $0x20] sm:$0xff]
    %v207 = vld [vmem:[%s3 + $0x28] sm:$0xff]
    %v208 = vld [vmem:[%s3 + $0x30] sm:$0xff]
    %v209 = vld [vmem:[%s3 + $0x38] sm:$0xff]
    %v210 = vld [vmem:[%s3 + $0x40] sm:$0xff]
    %v211 = vld [vmem:[%s3 + $0x48] sm:$0xff]
    %v212 = vld [vmem:[%s3 + $0x50] sm:$0xff]
    %v213 = vld [vmem:[%s3 + $0x58] sm:$0xff]
    %v214 = vld [vmem:[%s3 + $0x60] sm:$0xff]
    %v215 = vld [vmem:[%s3 + $0x68] sm:$0xff]
    %v216 = vld [vmem:[%s3 + $0x70] sm:$0xff]
    %v217 = vld [vmem:[%s3 + $0x78] sm:$0xff]
    %v218 = vld [vmem:[%s4] sm:$0x1]
    %v220 = vlaneseq
    %v221 = vshrl.u32 %v220, 7
    %v222 = vsub.s32 0, %v221
    %v223 = vrot.slane %v218, %v222
    %225 = vmatprep.subr.mxu0 0.0
    %226 = vmatpush1.msra.mxu0 %v217
    %227 = vmatprep.subr.mxu0 0.0
    %228 = vmatpush1.msra.mxu0 %v216
    %229 = vmatprep.subr.mxu0 0.0
    %230 = vmatpush1.msra.mxu0 %v215
    %231 = vmatprep.subr.mxu0 0.0
    %232 = vmatpush1.msra.mxu0 %v214
    %233 = vmatprep.subr.mxu0 0.0
    %234 = vmatpush1.msra.mxu0 %v213
    %235 = vmatprep.subr.mxu0 0.0
    %236 = vmatpush1.msra.mxu0 %v212
    %237 = vmatprep.subr.mxu0 0.0
    %238 = vmatpush1.msra.mxu0 %v211
    %239 = vmatprep.subr.mxu0 0.0
    %240 = vmatpush1.msra.mxu0 %v210
    %241 = vmatprep.subr.mxu0 0.0
    %242 = vmatpush1.msra.mxu0 %v209
    %243 = vmatprep.subr.mxu0 0.0
    %244 = vmatpush1.msra.mxu0 %v208
    %245 = vmatprep.subr.mxu0 0.0
    %246 = vmatpush1.msra.mxu0 %v207
    %247 = vmatprep.subr.mxu0 0.0
    %248 = vmatpush1.msra.mxu0 %v206
    %249 = vmatprep.subr.mxu0 0.0
    %250 = vmatpush1.msra.mxu0 %v205
    %251 = vmatprep.subr.mxu0 0.0
    %252 = vmatpush1.msra.mxu0 %v204
    %253 = vmatprep.subr.mxu0 0.0
    %254 = vmatpush1.msra.mxu0 %v203
    %255 = vmatprep.subr.mxu0 0.0
    %256 = vmatpush1.msra.mxu0 %v202
    %257 = vmatprep.subr.mxu0 0.0
    %258 = vmatpush2.msra.mxu0 0.0
    %259 = vmatprep.subr.mxu0 0.0
    %260 = vmatpush2.msra.mxu0 0.0
    %261 = vmatprep.subr.mxu0 0.0
    %262 = vmatpush2.msra.mxu0 0.0
    %263 = vmatprep.subr.mxu0 0.0
    %264 = vmatpush2.msra.mxu0 0.0
    %265 = vmatprep.subr.mxu0 0.0
    %266 = vmatpush2.msra.mxu0 0.0
    %267 = vmatprep.subr.mxu0 0.0
    %268 = vmatpush2.msra.mxu0 0.0
    %269 = vmatprep.subr.mxu0 0.0
    %270 = vmatpush2.msra.mxu0 0.0
    %271 = vmatprep.subr.mxu0 0.0
    %272 = vmatpush2.msra.mxu0 0.0
    %273 = vmatprep.subr.mxu0 0.0
    %274 = vmatpush2.msra.mxu0 0.0
    %275 = vmatprep.subr.mxu0 0.0
    %276 = vmatpush2.msra.mxu0 0.0
    %277 = vmatprep.subr.mxu0 0.0
    %278 = vmatpush2.msra.mxu0 0.0
    %279 = vmatprep.subr.mxu0 0.0
    %280 = vmatpush2.msra.mxu0 0.0
    %281 = vmatprep.subr.mxu0 0.0
    %282 = vmatpush2.msra.mxu0 0.0
    %283 = vmatprep.subr.mxu0 0.0
    %284 = vmatpush2.msra.mxu0 0.0
    %285 = vmatprep.subr.mxu0 0.0
    %286 = vmatpush2.msra.mxu0 0.0
    %287 = vmatprep.subr.mxu0 0.0
    %288 = vmatpush2.msra.mxu0 0.0
    %289 = vmatprep.mubr.f32.mxu0 0.0
    %290 = vmatmul.mubr.f32.gmra.mxu0 %v201
    %v291 = vpop.f32.mrf.mxu0
    %v292 = vadd.f32 %v223, %v291
    %v293 = vpop.f32.mrf.mxu0
    %294 = vdwg.mxu0
    %v295 = vxor.u32 %v292, 2147483648
    %v296 = vmul.f32 %v295, 1.442695
    %v297 = vpow.pop %v296
    %v298 = vadd.f32 %v297, 1.0
    %v299 = vrcp.pop %v298
    %v300 = vmul.f32 1.0, %v299
    %v301 = vlaneseq
    %v302 = vshrl.u32 %v301, 7
    %v303 = vsub.s32 0, %v302
    %v304 = vrot.slane %v300, %v303
    %306 = vbcast.lane.b32.xlu0 %v304, 256
    %v307 = vpop.permute.xlu0 %306
    %s309 = sor.u32 256, 8
    %310 = vbcast.lane.b32.xlu0 %v304, %s309
    %v311 = vpop.permute.xlu0 %310
    %s313 = sor.u32 256, 16
    %314 = vbcast.lane.b32.xlu0 %v304, %s313
    %v315 = vpop.permute.xlu0 %314
    %s317 = sor.u32 256, 24
    %318 = vbcast.lane.b32.xlu0 %v304, %s317
    %v319 = vpop.permute.xlu0 %318
    %v320 = vlaneseq
    %v321 = vshrl.u32 %v320, 7
    %v322 = vsub.s32 1, %v321
    %v323 = vrot.slane %v300, %v322
    %325 = vbcast.lane.b32.xlu0 %v323, 256
    %v326 = vpop.permute.xlu0 %325
    %s328 = sor.u32 256, 8
    %329 = vbcast.lane.b32.xlu0 %v323, %s328
    %v330 = vpop.permute.xlu0 %329
    %s332 = sor.u32 256, 16
    %333 = vbcast.lane.b32.xlu0 %v323, %s332
    %v334 = vpop.permute.xlu0 %333
    %s336 = sor.u32 256, 24
    %337 = vbcast.lane.b32.xlu0 %v323, %s336
    %v338 = vpop.permute.xlu0 %337
    %v339 = vmul.f32 %v21, %v307
    %v340 = vmul.f32 %v22, %v307
    %v341 = vmul.f32 %v23, %v311
    %v342 = vmul.f32 %v24, %v311
    %v343 = vmul.f32 %v25, %v315
    %v344 = vmul.f32 %v26, %v315
    %v345 = vmul.f32 %v27, %v319
    %v346 = vmul.f32 %v28, %v319
    %v347 = vmul.f32 %v29, %v326
    %v348 = vmul.f32 %v30, %v326
    %v349 = vmul.f32 %v31, %v330
    %v350 = vmul.f32 %v32, %v330
    %v351 = vmul.f32 %v33, %v334
    %v352 = vmul.f32 %v34, %v334
    %v353 = vmul.f32 %v35, %v338
    %v354 = vmul.f32 %v36, %v338
    %355 = vst [vmem:[#allocation2] sm:$0xff] %v339
    %356 = vst [vmem:[#allocation2 + $0x8] sm:$0xff] %v340
    %357 = vst [vmem:[#allocation2 + $0x10] sm:$0xff] %v341
    %358 = vst [vmem:[#allocation2 + $0x18] sm:$0xff] %v342
    %359 = vst [vmem:[#allocation2 + $0x20] sm:$0xff] %v343
    %360 = vst [vmem:[#allocation2 + $0x28] sm:$0xff] %v344
    %361 = vst [vmem:[#allocation2 + $0x30] sm:$0xff] %v345
    %362 = vst [vmem:[#allocation2 + $0x38] sm:$0xff] %v346
    %363 = vst [vmem:[#allocation2 + $0x40] sm:$0xff] %v347
    %364 = vst [vmem:[#allocation2 + $0x48] sm:$0xff] %v348
    %365 = vst [vmem:[#allocation2 + $0x50] sm:$0xff] %v349
    %366 = vst [vmem:[#allocation2 + $0x58] sm:$0xff] %v350
    %367 = vst [vmem:[#allocation2 + $0x60] sm:$0xff] %v351
    %368 = vst [vmem:[#allocation2 + $0x68] sm:$0xff] %v352
    %369 = vst [vmem:[#allocation2 + $0x70] sm:$0xff] %v353
    %370 = vst [vmem:[#allocation2 + $0x78] sm:$0xff] %v354
    // Predicated region
    $region22: #{tpu_custom_call.1} parent=1 // pred_check
      _
    $region23: #{tpu_custom_call.1} parent=1 // pred_check_branch
      %372 = sbr.rel (0) target = $region25
    $region24: #{tpu_custom_call.1} parent=1 // pred_region
      %s374 = ssub.s32 2048, 2048
      %375 = vsyncadd [#allocation3], %s374
      %s376 = sshll.u32 [#allocation2], 4
      %s377 = int_to_ptr.vmem [resolvable:$true] %s376
      %382 = dma.vmem_to_hbm [thread:$0]  %s377, 2048, %s5, [#allocation3], 256, 256, 16
    $region25: #{tpu_custom_call.1} parent=1 // pred_fallthru
      _
    // Predicated region
    $region26: #{tpu_custom_call.1} parent=1 // pred_check
      _
    $region27: #{tpu_custom_call.1} parent=1 // pred_check_branch
      %384 = sbr.rel (0) target = $region29
    $region28: #{tpu_custom_call.1} parent=1 // pred_region
      %385 = dma.done [#allocation3], 2048
    $region29: #{tpu_custom_call.1} parent=1 // pred_fallthru
      _
    %386 = vsyncpa [#allocation3], 1

</llo_original>
